<compile_context>
chip_gen: v6e
topology: v6e:2x2x1
jax: 0.10.0
libtpu: 0.0.40
codegen_flags: <defaults>
</compile_context>

<pallas_src>
import functools

import jax
import jax.numpy as jnp
from jax.experimental import pallas as pl
from jax.experimental.pallas import tpu as pltpu


def _round_up(x: int, m: int) -> int:
    return ((x + m - 1) // m) * m


def _cdiv(a: int, b: int) -> int:
    return (a + b - 1) // b


def _proj_kernel(x_ref, w_ref, b_ref, o_ref):
    """One output row-tile: o = x @ W + b (full K and N resident in VMEM)."""
    # In-kernel bf16 cast of the activations (W is already bf16); f32 accumulate.
    x_bf16 = x_ref[...].astype(jnp.bfloat16)
    acc = jnp.dot(x_bf16, w_ref[...], preferred_element_type=jnp.float32)
    o_ref[...] = (acc + b_ref[...]).astype(o_ref.dtype)


@functools.partial(jax.jit, static_argnames=("tm_cap", "out_dtype"))
def linear_pallas(x2d, w_bf16, b2d_f32, *, tm_cap=1024, out_dtype=None):
    """x2d: (M, K) f32; w_bf16: (K, N) bf16; b2d_f32: (1, N) f32 -> (M, N)."""
    M, K = x2d.shape
    K2, N = w_bf16.shape
    assert K == K2 and b2d_f32.shape == (1, N)

    if out_dtype is None:
        out_dtype = x2d.dtype

    # Row-tile selection:
    #  * small M: ~half the rows per tile (>=2 blocks so v7x's second
    #    TensorCore gets work), rounded to a multiple of 16.
    #  * large M: cap at tm_cap to bound the double-buffered VMEM footprint.
    if M <= tm_cap:
        tm = max(16, _round_up(_cdiv(M, 2), 16))
    else:
        tm = tm_cap
    grid_m = _cdiv(M, tm)  # ragged last block handled by Pallas masking

    cost = pl.CostEstimate(
        flops=2 * M * K * N,
        transcendentals=0,
        bytes_accessed=(
            M * K * jnp.dtype(x2d.dtype).itemsize
            + K * N * jnp.dtype(w_bf16.dtype).itemsize
            + N * 4
            + M * N * jnp.dtype(out_dtype).itemsize
        ),
    )

    return pl.pallas_call(
        _proj_kernel,
        out_shape=jax.ShapeDtypeStruct((M, N), out_dtype),
        grid_spec=pltpu.PrefetchScalarGridSpec(
            num_scalar_prefetch=0,
            grid=(grid_m,),
            in_specs=[
                # x row-tile: streams over M (double-buffered by default).
                pl.BlockSpec((tm, K), lambda i: (i, 0)),
                # Full weight, constant index_map -> fetched once, resident;
                # single buffer since it never changes.
                pl.BlockSpec((K, N), lambda i: (0, 0),
                             pipeline_mode=pl.Buffered(1)),
                # Full bias, resident, single buffer.
                pl.BlockSpec((1, N), lambda i: (0, 0),
                             pipeline_mode=pl.Buffered(1)),
            ],
            out_specs=pl.BlockSpec((tm, N), lambda i: (i, 0)),
        ),
        compiler_params=pltpu.CompilerParams(
            dimension_semantics=("parallel",),
            vmem_limit_bytes=32 << 20,
        ),
        cost_estimate=cost,
    )(x2d, w_bf16, b2d_f32)


class VisionProjPallas:
    """JAX/Pallas equivalent of:
        nn.Sequential(nn.Linear(ve_dim, lm_dim))
    applied to image_encoders of shape (..., ve_dim).
    """

    def __init__(self, ve_dim=768, lm_dim=512, key=None):
        self.ve_dim = ve_dim
        self.lm_dim = lm_dim
        if key is None:
            key = jax.random.PRNGKey(0)
        kw, kb = jax.random.split(key)
        # Deterministic init mimicking nn.Linear's uniform(-1/sqrt(K), 1/sqrt(K)).
        bound = 1.0 / float(ve_dim) ** 0.5
        # PyTorch weight is (lm_dim, ve_dim); store transposed (ve_dim, lm_dim).
        self.w = jax.random.uniform(
            kw, (ve_dim, lm_dim), jnp.float32, minval=-bound, maxval=bound
        )
        self.b = jax.random.uniform(
            kb, (lm_dim,), jnp.float32, minval=-bound, maxval=bound
        )
        # Pre-cast / pre-reshape the kernel-side parameter buffers once.
        self.w_bf16 = self.w.astype(jnp.bfloat16)
        self.b2d = self.b.reshape(1, lm_dim).astype(jnp.float32)

    def __call__(self, image_encoders):
        *lead, K = image_encoders.shape
        assert K == self.ve_dim
        x2d = image_encoders.reshape(-1, K)
        y2d = linear_pallas(x2d, self.w_bf16, self.b2d)
        return y2d.reshape(*lead, self.lm_dim)


if __name__ == "__main__":
    # Small shapes consistent with the module:
    # (batch, seq, ve_dim) -> (batch, seq, lm_dim)
    batch, seq, ve_dim, lm_dim = 2, 8, 256, 128

    key = jax.random.PRNGKey(0)
    k_x, k_p, k_x2 = jax.random.split(key, 3)
    image_encoders = jax.random.normal(k_x, (batch, seq, ve_dim), jnp.float32)

    model = VisionProjPallas(ve_dim=ve_dim, lm_dim=lm_dim, key=k_p)
    out = model(image_encoders)
    out = jax.block_until_ready(out)

    # Correctness vs. plain JAX f32 reference (MXU inputs are bf16 with f32
    # accumulation, so tolerance accounts for bf16 input rounding).
    ref = image_encoders @ model.w + model.b
    assert out.shape == (batch, seq, lm_dim)
    assert out.dtype == image_encoders.dtype
    assert jnp.allclose(out, ref, atol=1e-2, rtol=1e-2), (
        float(jnp.max(jnp.abs(out - ref)))
    )

    # Ragged-M path (token count not a multiple of the row tile): exercises the
    # cdiv grid with a masked last block and the >=2-tile (v7x) split.
    x_ragged = jax.random.normal(k_x2, (3, 7, ve_dim), jnp.float32)
    out2 = jax.block_until_ready(model(x_ragged))
    ref2 = x_ragged @ model.w + model.b
    assert out2.shape == (3, 7, lm_dim)
    assert jnp.allclose(out2, ref2, atol=1e-2, rtol=1e-2), (
        float(jnp.max(jnp.abs(out2 - ref2)))
    )

    print("KERNEL_OK")
</pallas_src>

<mosaic_0001>
module attributes {stable_mosaic.version = 11 : i64} {
  func.func @_proj_kernel(%arg0: i32, %arg1: memref<16x256xf32, #tpu.memory_space<vmem>>, %arg2: memref<256x128xbf16, #tpu.memory_space<vmem>>, %arg3: memref<1x128xf32, #tpu.memory_space<vmem>>, %arg4: memref<16x128xf32, #tpu.memory_space<vmem>>) attributes {dimension_semantics = [#tpu.dimension_semantics<parallel>], iteration_bounds = array<i64: 1>, scalar_prefetch = 0 : i64, scratch_operands = 0 : i64, tpu.core_type = #tpu.core_type<tc>, window_params = [{transform_indices = @transform_0, window_bounds = array<i64: 16, 256>}, {pipeline_mode = #tpu.pipeline_mode<synchronous>, transform_indices = @transform_1, window_bounds = array<i64: 256, 128>}, {pipeline_mode = #tpu.pipeline_mode<synchronous>, transform_indices = @transform_2, window_bounds = array<i64: 1, 128>}, {transform_indices = @transform_3, window_bounds = array<i64: 16, 128>}]} {
    %c0 = arith.constant 0 : index
    %c0_0 = arith.constant 0 : index
    %0 = vector.load %arg1[%c0, %c0_0] : memref<16x256xf32, #tpu.memory_space<vmem>>, vector<16x256xf32>
    %1 = arith.truncf %0 : vector<16x256xf32> to vector<16x256xbf16>
    %c0_1 = arith.constant 0 : index
    %c0_2 = arith.constant 0 : index
    %2 = vector.load %arg2[%c0_1, %c0_2] : memref<256x128xbf16, #tpu.memory_space<vmem>>, vector<256x128xbf16>
    %cst = arith.constant dense<0.000000e+00> : vector<16x128xf32>
    %3 = tpu.matmul %1, %2, %cst {dimension_numbers = #tpu.dot_dimension_numbers<[1], [0], [0], [1], [0, 0, 1, 1], [], []>} : vector<16x256xbf16>, vector<256x128xbf16>, vector<16x128xf32> -> vector<16x128xf32>
    %c0_3 = arith.constant 0 : index
    %c0_4 = arith.constant 0 : index
    %4 = vector.load %arg3[%c0_3, %c0_4] : memref<1x128xf32, #tpu.memory_space<vmem>>, vector<1x128xf32>
    %5 = vector.broadcast %4 : vector<1x128xf32> to vector<16x128xf32>
    %6 = arith.addf %3, %5 : vector<16x128xf32>
    %c0_5 = arith.constant 0 : index
    %c0_6 = arith.constant 0 : index
    %7 = vector.load %arg4[%c0_5, %c0_6] : memref<16x128xf32, #tpu.memory_space<vmem>>, vector<16x128xf32>
    tpu.vector_store %arg4[%c0_5, %c0_6], %6 {strides = array<i32>} : memref<16x128xf32, #tpu.memory_space<vmem>>, vector<16x128xf32>,
    return
  }
  func.func @transform_0(%arg0: i32) -> (i32, i32) {
    %c0_i32 = arith.constant 0 : i32
    %c0_i32_0 = arith.constant 0 : i32
    return %arg0, %c0_i32 : i32, i32
  }
  func.func @transform_1(%arg0: i32) -> (i32, i32) {
    %c0_i32 = arith.constant 0 : i32
    %c0_i32_0 = arith.constant 0 : i32
    %c0_i32_1 = arith.constant 0 : i32
    return %c0_i32, %c0_i32_0 : i32, i32
  }
  func.func @transform_2(%arg0: i32) -> (i32, i32) {
    %c0_i32 = arith.constant 0 : i32
    %c0_i32_0 = arith.constant 0 : i32
    %c0_i32_1 = arith.constant 0 : i32
    return %c0_i32, %c0_i32_0 : i32, i32
  }
  func.func @transform_3(%arg0: i32) -> (i32, i32) {
    %c0_i32 = arith.constant 0 : i32
    %c0_i32_0 = arith.constant 0 : i32
    return %arg0, %c0_i32 : i32, i32
  }
}

</mosaic_0001>

<llo_original>
// kernel: linear_pallas.1
$region0: #{linear_pallas.1}
  #allocation0 [shape = 'u32[]', space=smem, size = 0x4, offset = 0x4, fixed_abs, tag = 'smem constant byte address 0x4 - core index']
  #allocation1 [shape = 'u32[144,128]{1,0:T(1,128)}', space=vmem, size = 0x12000, scoped, tag = 'internal scratch']
  %s0 = inlined_call_operand.hbm [shape: f32[16,256], index: 0, kind: input, shape index: {}]
  %s1 = inlined_call_operand.hbm [shape: bf16[256,128], index: 1, kind: input, shape index: {}]
  %s2 = inlined_call_operand.vmem [shape: f32[1,128], index: 2, kind: input, shape index: {}]
  %s3 = inlined_call_operand.hbm [shape: f32[16,128], index: 3, kind: output, shape index: {}]
  %s4 = sld [smem:[#allocation0]]
  $region30: #{linear_pallas.1} parent=0
    _
  %s6 = ssub.s32 1, %s4
  %s7 = scalar_select 0, %s6, %s4
  $region1: #{linear_pallas.1} parent=0
    #allocation2 [shape = 'u8[16384]{0}', space=vmem, size = 0x4000, scoped, tag = 'input window, operand 0, single buffered']
    #allocation3 [shape = 's32[1]{0}', space=sflag, size = 0x4, scoped, tag = 'scoped memory for linear_pallas.1']
    #allocation4 [shape = 's32[1]{0}', space=sflag, size = 0x4, scoped, tag = 'scoped memory for linear_pallas.1']
    #allocation5 [shape = 'u8[65536]{0}', space=vmem, size = 0x10000, scoped, tag = 'input window, operand 1, single buffered']
    #allocation6 [shape = 's32[1]{0}', space=sflag, size = 0x4, scoped, tag = 'scoped memory for linear_pallas.1']
    #allocation7 [shape = 'u8[8192]{0}', space=vmem, size = 0x2000, scoped, tag = 'output window, operand 0, single buffered']
    %8 = vsyncpa [#allocation3], 0
    %9 = vsyncpa [#allocation6], 0
    %10 = vsyncpa [#allocation4], 0
    // Predicated region
    $region2: #{linear_pallas.1} parent=1 // pred_check
      _
    $region3: #{linear_pallas.1} parent=1 // pred_check_branch
      %12 = sbr.rel (0) target = $region5
    $region4: #{linear_pallas.1} parent=1 // pred_region
      %s14 = ssub.s32 512, 512
      %15 = vsyncadd [#allocation3], %s14
      %s16 = sshll.u32 [#allocation2], 4
      %s17 = int_to_ptr.vmem [resolvable:$true] %s16
      %22 = dma.hbm_to_vmem [thread:$0]  %s0, 512, %s17, [#allocation3], 256, 256, 16
    $region5: #{linear_pallas.1} parent=1 // pred_fallthru
      _
    // Predicated region
    $region6: #{linear_pallas.1} parent=1 // pred_check
      _
    $region7: #{linear_pallas.1} parent=1 // pred_check_branch
      %24 = sbr.rel (0) target = $region9
    $region8: #{linear_pallas.1} parent=1 // pred_region
      %s26 = ssub.s32 2048, 2048
      %27 = vsyncadd [#allocation6], %s26
      %s28 = sshll.u32 [#allocation5], 4
      %s29 = int_to_ptr.vmem [resolvable:$true] %s28
      %34 = dma.hbm_to_vmem [thread:$0]  %s1, 2048, %s29, [#allocation6], 64, 64, 4
    $region9: #{linear_pallas.1} parent=1 // pred_fallthru
      _
    // Predicated region
    $region10: #{linear_pallas.1} parent=1 // pred_check
      _
    $region11: #{linear_pallas.1} parent=1 // pred_check_branch
      %36 = sbr.rel (0) target = $region13
    $region12: #{linear_pallas.1} parent=1 // pred_region
      _
    $region13: #{linear_pallas.1} parent=1 // pred_fallthru
      _
    // Predicated region
    $region14: #{linear_pallas.1} parent=1 // pred_check
      _
    $region15: #{linear_pallas.1} parent=1 // pred_check_branch
      %38 = sbr.rel (0) target = $region17
    $region16: #{linear_pallas.1} parent=1 // pred_region
      %39 = dma.done [#allocation3], 512
    $region17: #{linear_pallas.1} parent=1 // pred_fallthru
      _
    // Predicated region
    $region18: #{linear_pallas.1} parent=1 // pred_check
      _
    $region19: #{linear_pallas.1} parent=1 // pred_check_branch
      %41 = sbr.rel (0) target = $region21
    $region20: #{linear_pallas.1} parent=1 // pred_region
      %42 = dma.done [#allocation6], 2048
    $region21: #{linear_pallas.1} parent=1 // pred_fallthru
      _
    %v44 = vld [vmem:[#allocation2] sm:$0xff]
    %v45 = vld [vmem:[#allocation2 + $0x8] sm:$0xff]
    %v46 = vld [vmem:[#allocation2 + $0x10] sm:$0xff]
    %v47 = vld [vmem:[#allocation2 + $0x18] sm:$0xff]
    %v48 = vpack.c.bf16 %v46, %v44
    %v49 = vpack.c.bf16 %v47, %v45
    %v50 = vld [vmem:[#allocation5] sm:$0xf]
    %v51 = vld [vmem:[#allocation5 + $0x4] sm:$0xf]
    %v52 = vld [vmem:[#allocation5 + $0x8] sm:$0xf]
    %v53 = vld [vmem:[#allocation5 + $0xc] sm:$0xf]
    %v54 = vld [vmem:[#allocation5 + $0x10] sm:$0xf]
    %v55 = vld [vmem:[#allocation5 + $0x14] sm:$0xf]
    %v56 = vld [vmem:[#allocation5 + $0x18] sm:$0xf]
    %v57 = vld [vmem:[#allocation5 + $0x1c] sm:$0xf]
    %v58 = vld [vmem:[#allocation5 + $0x20] sm:$0xf]
    %v59 = vld [vmem:[#allocation5 + $0x24] sm:$0xf]
    %v60 = vld [vmem:[#allocation5 + $0x28] sm:$0xf]
    %v61 = vld [vmem:[#allocation5 + $0x2c] sm:$0xf]
    %v62 = vld [vmem:[#allocation5 + $0x30] sm:$0xf]
    %v63 = vld [vmem:[#allocation5 + $0x34] sm:$0xf]
    %v64 = vld [vmem:[#allocation5 + $0x38] sm:$0xf]
    %v65 = vld [vmem:[#allocation5 + $0x3c] sm:$0xf]
    %v66 = vld [vmem:[#allocation5 + $0x40] sm:$0xf]
    %v67 = vld [vmem:[#allocation5 + $0x44] sm:$0xf]
    %v68 = vld [vmem:[#allocation5 + $0x48] sm:$0xf]
    %v69 = vld [vmem:[#allocation5 + $0x4c] sm:$0xf]
    %v70 = vld [vmem:[#allocation5 + $0x50] sm:$0xf]
    %v71 = vld [vmem:[#allocation5 + $0x54] sm:$0xf]
    %v72 = vld [vmem:[#allocation5 + $0x58] sm:$0xf]
    %v73 = vld [vmem:[#allocation5 + $0x5c] sm:$0xf]
    %v74 = vld [vmem:[#allocation5 + $0x60] sm:$0xf]
    %v75 = vld [vmem:[#allocation5 + $0x64] sm:$0xf]
    %v76 = vld [vmem:[#allocation5 + $0x68] sm:$0xf]
    %v77 = vld [vmem:[#allocation5 + $0x6c] sm:$0xf]
    %v78 = vld [vmem:[#allocation5 + $0x70] sm:$0xf]
    %v79 = vld [vmem:[#allocation5 + $0x74] sm:$0xf]
    %v80 = vld [vmem:[#allocation5 + $0x78] sm:$0xf]
    %v81 = vld [vmem:[#allocation5 + $0x7c] sm:$0xf]
    %v82 = vld [vmem:[%s2] sm:$0x1]
    %v84 = vlaneseq
    %v85 = vshrl.u32 %v84, 7
    %v86 = vsub.s32 0, %v85
    %v87 = vrot.slane %v82, %v86
    %v121 = vunpack.c.l.b16 %v50
    %v122 = vunpack.c.l.b16 %v51
    %v123 = vunpack.c.l.b16 %v52
    %v124 = vunpack.c.l.b16 %v53
    %v125 = vunpack.c.l.b16 %v54
    %v126 = vunpack.c.l.b16 %v55
    %v127 = vunpack.c.l.b16 %v56
    %v128 = vunpack.c.l.b16 %v57
    %v129 = vunpack.c.l.b16 %v58
    %v130 = vunpack.c.l.b16 %v59
    %v131 = vunpack.c.l.b16 %v60
    %v132 = vunpack.c.l.b16 %v61
    %v133 = vunpack.c.l.b16 %v62
    %v134 = vunpack.c.l.b16 %v63
    %v135 = vunpack.c.l.b16 %v64
    %v136 = vunpack.c.l.b16 %v65
    %v137 = vunpack.c.l.b16 %v66
    %v138 = vunpack.c.l.b16 %v67
    %v139 = vunpack.c.l.b16 %v68
    %v140 = vunpack.c.l.b16 %v69
    %v141 = vunpack.c.l.b16 %v70
    %v142 = vunpack.c.l.b16 %v71
    %v143 = vunpack.c.l.b16 %v72
    %v144 = vunpack.c.l.b16 %v73
    %v145 = vunpack.c.l.b16 %v74
    %v146 = vunpack.c.l.b16 %v75
    %v147 = vunpack.c.l.b16 %v76
    %v148 = vunpack.c.l.b16 %v77
    %v149 = vunpack.c.l.b16 %v78
    %v150 = vunpack.c.l.b16 %v79
    %v151 = vunpack.c.l.b16 %v80
    %v152 = vunpack.c.l.b16 %v81
    %v153 = vpack.c.b16 %v122, %v121
    %v154 = vpack.c.b16 %v124, %v123
    %v155 = vpack.c.b16 %v126, %v125
    %v156 = vpack.c.b16 %v128, %v127
    %v157 = vpack.c.b16 %v130, %v129
    %v158 = vpack.c.b16 %v132, %v131
    %v159 = vpack.c.b16 %v134, %v133
    %v160 = vpack.c.b16 %v136, %v135
    %v161 = vpack.c.b16 %v138, %v137
    %v162 = vpack.c.b16 %v140, %v139
    %v163 = vpack.c.b16 %v142, %v141
    %v164 = vpack.c.b16 %v144, %v143
    %v165 = vpack.c.b16 %v146, %v145
    %v166 = vpack.c.b16 %v148, %v147
    %v167 = vpack.c.b16 %v150, %v149
    %v168 = vpack.c.b16 %v152, %v151
    %185 = vmatprep.subr.bf16.mxu0 0
    %186 = vmatpush1.bf16.msra.mxu0 %v160
    %187 = vmatprep.subr.bf16.mxu0 0
    %188 = vmatpush1.bf16.msra.mxu0 %v159
    %189 = vmatprep.subr.bf16.mxu0 0
    %190 = vmatpush1.bf16.msra.mxu0 %v158
    %191 = vmatprep.subr.bf16.mxu0 0
    %192 = vmatpush1.bf16.msra.mxu0 %v157
    %193 = vmatprep.subr.bf16.mxu0 0
    %194 = vmatpush1.bf16.msra.mxu0 %v156
    %195 = vmatprep.subr.bf16.mxu0 0
    %196 = vmatpush1.bf16.msra.mxu0 %v155
    %197 = vmatprep.subr.bf16.mxu0 0
    %198 = vmatpush1.bf16.msra.mxu0 %v154
    %199 = vmatprep.subr.bf16.mxu0 0
    %200 = vmatpush1.bf16.msra.mxu0 %v153
    %201 = vmatprep.subr.bf16.mxu0 0
    %202 = vmatpush2.bf16.msra.mxu0 %v168
    %203 = vmatprep.subr.bf16.mxu0 0
    %204 = vmatpush2.bf16.msra.mxu0 %v167
    %205 = vmatprep.subr.bf16.mxu0 0
    %206 = vmatpush2.bf16.msra.mxu0 %v166
    %207 = vmatprep.subr.bf16.mxu0 0
    %208 = vmatpush2.bf16.msra.mxu0 %v165
    %209 = vmatprep.subr.bf16.mxu0 0
    %210 = vmatpush2.bf16.msra.mxu0 %v164
    %211 = vmatprep.subr.bf16.mxu0 0
    %212 = vmatpush2.bf16.msra.mxu0 %v163
    %213 = vmatprep.subr.bf16.mxu0 0
    %214 = vmatpush2.bf16.msra.mxu0 %v162
    %215 = vmatprep.subr.bf16.mxu0 0
    %216 = vmatpush2.bf16.msra.mxu0 %v161
    %217 = vmatprep.mubr.bf16.mxu0 %v49
    %218 = vmatmul.mubr.bf16.gmra.mxu0 %v48
    %v219 = vpop.f32.mrf.mxu0
    %v220 = vadd.f32 %v87, %v219
    %v221 = vpop.f32.mrf.mxu0
    %v222 = vpop.f32.mrf.mxu0
    %v223 = vadd.f32 %v87, %v222
    %v224 = vpop.f32.mrf.mxu0
    %225 = vdwg.mxu0
    %226 = vst [vmem:[#allocation7] sm:$0xff] %v220
    %227 = vst [vmem:[#allocation7 + $0x8] sm:$0xff] %v223
    // Predicated region
    $region22: #{linear_pallas.1} parent=1 // pred_check
      _
    $region23: #{linear_pallas.1} parent=1 // pred_check_branch
      %229 = sbr.rel (0) target = $region25
    $region24: #{linear_pallas.1} parent=1 // pred_region
      %s231 = ssub.s32 256, 256
      %232 = vsyncadd [#allocation4], %s231
      %s233 = sshll.u32 [#allocation7], 4
      %s234 = int_to_ptr.vmem [resolvable:$true] %s233
      %239 = dma.vmem_to_hbm [thread:$0]  %s234, 256, %s3, [#allocation4], 128, 128, 8
    $region25: #{linear_pallas.1} parent=1 // pred_fallthru
      _
    // Predicated region
    $region26: #{linear_pallas.1} parent=1 // pred_check
      _
    $region27: #{linear_pallas.1} parent=1 // pred_check_branch
      %241 = sbr.rel (0) target = $region29
    $region28: #{linear_pallas.1} parent=1 // pred_region
      %242 = dma.done [#allocation4], 256
    $region29: #{linear_pallas.1} parent=1 // pred_fallthru
      _
    %243 = vsyncpa [#allocation3], 1
    %244 = vsyncpa [#allocation6], 1
    %245 = vsyncpa [#allocation4], 1

</llo_original>
